<compile_context>
chip_gen: v6e
topology: v6e:2x2x1
jax: 0.10.0
libtpu: 0.0.40
codegen_flags: <defaults>
</compile_context>

<pallas_src>
import jax
import jax.numpy as jnp
from jax.experimental import pallas as pl
from jax.experimental.pallas import tpu as pltpu


def _unsqueeze_kernel(x_ref, o_ref):
    # x_ref: (tm, tn) view, o_ref: (1, tm, tn) view.  The unsqueeze is just a
    # copy into the leading size-1 axis of the output block.
    o_ref[0] = x_ref[...]


def _pick_tile(dim, pref, mult):
    """Largest legal tile <= pref for an axis of extent `dim`.

    Full-extent blocks are exempt from the (8, 128) divisibility rule, so any
    dim <= pref is taken whole (single step along that axis); otherwise round
    pref down to a multiple of `mult` (8 sublanes / 128 lanes) and let Pallas
    pad/mask the ragged edge tile."""
    if dim <= pref:
        return dim
    return max((pref // mult) * mult, mult)


def unsqueeze_neg3(x, *, max_tm=512, max_tn=1024):
    """torch.unsqueeze(x, -3) for a 2-D float32 array -> (1, M, N)."""
    M, N = x.shape
    # Large, lane-dense tiles: a (512, 1024) f32 tile is 2 MiB, so the
    # double-buffered footprint (2x input tile + 2x output tile) is ~8 MiB.
    # That fits v5e's 16 MiB scoped-VMEM default and leaves ample headroom on
    # v6e/v7x (32 MiB scoped), while keeping the kernel near the HBM roofline
    # instead of paying ~600 cycles of pipeline overhead per 4 KiB vreg-sized
    # block as the previous (8, 128) tiling did.
    tm = _pick_tile(M, max_tm, 8)
    tn = _pick_tile(N, max_tn, 128)
    grid = (pl.cdiv(M, tm), pl.cdiv(N, tn))
    return pl.pallas_call(
        _unsqueeze_kernel,
        out_shape=jax.ShapeDtypeStruct((1, M, N), x.dtype),
        grid=grid,
        in_specs=[pl.BlockSpec((tm, tn), lambda i, j: (i, j))],
        out_specs=pl.BlockSpec((1, tm, tn), lambda i, j: (0, i, j)),
        compiler_params=pltpu.CompilerParams(
            # Both axes are independent -> megacore sharding on v7x (2 TCs).
            dimension_semantics=("parallel", "parallel")),
    )(x)


if __name__ == "__main__":
    key = jax.random.PRNGKey(0)
    k1, k2 = jax.random.split(key)

    # Small shape consistent with the module's ([-1, -1], float32) input.
    # Whole-array single block: one DMA in, one copy, one DMA out.
    x_small = jax.random.normal(k1, (16, 256), dtype=jnp.float32)
    out_small = jax.block_until_ready(unsqueeze_neg3(x_small))
    ref_small = jnp.expand_dims(x_small, -3)
    assert out_small.shape == (1, 16, 256) and out_small.dtype == jnp.float32
    assert jnp.array_equal(out_small, ref_small)

    # Exercise the multi-step grid path (including ragged edge tiles) with
    # deliberately small tile caps so the test shape stays tiny.
    x_tiled = jax.random.normal(k2, (72, 640), dtype=jnp.float32)
    out_tiled = jax.block_until_ready(
        unsqueeze_neg3(x_tiled, max_tm=16, max_tn=256))
    ref_tiled = jnp.expand_dims(x_tiled, -3)
    assert out_tiled.shape == (1, 72, 640) and out_tiled.dtype == jnp.float32
    assert jnp.array_equal(out_tiled, ref_tiled)

    print("KERNEL_OK")
</pallas_src>

<mosaic_0001>
module attributes {stable_mosaic.version = 11 : i64} {
  func.func @_unsqueeze_kernel(%arg0: i32, %arg1: i32, %arg2: memref<16x256xf32, #tpu.memory_space<vmem>>, %arg3: memref<1x16x256xf32, #tpu.memory_space<vmem>>) attributes {dimension_semantics = [#tpu.dimension_semantics<parallel>, #tpu.dimension_semantics<parallel>], iteration_bounds = array<i64: 1, 1>, scalar_prefetch = 0 : i64, scratch_operands = 0 : i64, tpu.core_type = #tpu.core_type<tc>, window_params = [{transform_indices = @transform_0, window_bounds = array<i64: 16, 256>}, {transform_indices = @transform_1, window_bounds = array<i64: 1, 16, 256>}]} {
    %c0 = arith.constant 0 : index
    %c0_0 = arith.constant 0 : index
    %0 = vector.load %arg2[%c0, %c0_0] : memref<16x256xf32, #tpu.memory_space<vmem>>, vector<16x256xf32>
    %c0_1 = arith.constant 0 : index
    %c0_2 = arith.constant 0 : index
    %c0_3 = arith.constant 0 : index
    %1 = vector.load %arg3[%c0_1, %c0_2, %c0_3] : memref<1x16x256xf32, #tpu.memory_space<vmem>>, vector<1x16x256xf32>
    %2 = vector.shape_cast %1 : vector<1x16x256xf32> to vector<16x256xf32>
    %3 = vector.shape_cast %0 : vector<16x256xf32> to vector<1x16x256xf32>
    tpu.vector_store %arg3[%c0_1, %c0_2, %c0_3], %3 {strides = array<i32>} : memref<1x16x256xf32, #tpu.memory_space<vmem>>, vector<1x16x256xf32>,
    return
  }
  func.func @transform_0(%arg0: i32, %arg1: i32) -> (i32, i32) {
    %c0_i32 = arith.constant 0 : i32
    return %arg0, %arg1 : i32, i32
  }
  func.func @transform_1(%arg0: i32, %arg1: i32) -> (i32, i32, i32) {
    %c0_i32 = arith.constant 0 : i32
    %c0_i32_0 = arith.constant 0 : i32
    return %c0_i32, %arg0, %arg1 : i32, i32, i32
  }
}

</mosaic_0001>

<llo_original>
// kernel: tpu_custom_call.1
$region0: #{tpu_custom_call.1}
  #allocation0 [shape = 'u32[]', space=smem, size = 0x4, offset = 0x4, fixed_abs, tag = 'smem constant byte address 0x4 - core index']
  #allocation1 [shape = 'u32[144,128]{1,0:T(1,128)}', space=vmem, size = 0x12000, scoped, tag = 'internal scratch']
  %s0 = inlined_call_operand.hbm [shape: f32[16,256], index: 0, kind: input, shape index: {}]
  %s1 = inlined_call_operand.hbm [shape: f32[1,16,256], index: 1, kind: output, shape index: {}]
  %s2 = sld [smem:[#allocation0]]
  $region18: #{tpu_custom_call.1} parent=0
    _
  %s4 = ssub.s32 1, %s2
  %s5 = scalar_select 0, %s4, %s2
  $region1: #{tpu_custom_call.1} parent=0
    #allocation2 [shape = 'u8[16384]{0}', space=vmem, size = 0x4000, scoped, tag = 'input window, operand 0, single buffered']
    #allocation3 [shape = 's32[1]{0}', space=sflag, size = 0x4, scoped, tag = 'scoped memory for tpu_custom_call.1']
    #allocation4 [shape = 's32[1]{0}', space=sflag, size = 0x4, scoped, tag = 'scoped memory for tpu_custom_call.1']
    #allocation5 [shape = 'u8[16384]{0}', space=vmem, size = 0x4000, scoped, tag = 'output window, operand 0, single buffered']
    %6 = vsyncpa [#allocation3], 0
    %7 = vsyncpa [#allocation4], 0
    // Predicated region
    $region2: #{tpu_custom_call.1} parent=1 // pred_check
      _
    $region3: #{tpu_custom_call.1} parent=1 // pred_check_branch
      %9 = sbr.rel (0) target = $region5
    $region4: #{tpu_custom_call.1} parent=1 // pred_region
      %s11 = ssub.s32 512, 512
      %12 = vsyncadd [#allocation3], %s11
      %s13 = sshll.u32 [#allocation2], 4
      %s14 = int_to_ptr.vmem [resolvable:$true] %s13
      %19 = dma.hbm_to_vmem [thread:$0]  %s0, 512, %s14, [#allocation3], 256, 256, 16
    $region5: #{tpu_custom_call.1} parent=1 // pred_fallthru
      _
    // Predicated region
    $region6: #{tpu_custom_call.1} parent=1 // pred_check
      _
    $region7: #{tpu_custom_call.1} parent=1 // pred_check_branch
      %21 = sbr.rel (0) target = $region9
    $region8: #{tpu_custom_call.1} parent=1 // pred_region
      %22 = dma.done [#allocation3], 512
    $region9: #{tpu_custom_call.1} parent=1 // pred_fallthru
      _
    %v23 = vld [vmem:[#allocation2] sm:$0xff]
    %v24 = vld [vmem:[#allocation2 + $0x8] sm:$0xff]
    %v25 = vld [vmem:[#allocation2 + $0x10] sm:$0xff]
    %v26 = vld [vmem:[#allocation2 + $0x18] sm:$0xff]
    %27 = vst [vmem:[#allocation5] sm:$0xff] %v23
    %28 = vst [vmem:[#allocation5 + $0x8] sm:$0xff] %v24
    %29 = vst [vmem:[#allocation5 + $0x10] sm:$0xff] %v25
    %30 = vst [vmem:[#allocation5 + $0x18] sm:$0xff] %v26
    // Predicated region
    $region10: #{tpu_custom_call.1} parent=1 // pred_check
      _
    $region11: #{tpu_custom_call.1} parent=1 // pred_check_branch
      %32 = sbr.rel (0) target = $region13
    $region12: #{tpu_custom_call.1} parent=1 // pred_region
      %s34 = ssub.s32 512, 512
      %35 = vsyncadd [#allocation4], %s34
      %s36 = sshll.u32 [#allocation5], 4
      %s37 = int_to_ptr.vmem [resolvable:$true] %s36
      %42 = dma.vmem_to_hbm [thread:$0]  %s37, 512, %s1, [#allocation4], 256, 256, 16
    $region13: #{tpu_custom_call.1} parent=1 // pred_fallthru
      _
    // Predicated region
    $region14: #{tpu_custom_call.1} parent=1 // pred_check
      _
    $region15: #{tpu_custom_call.1} parent=1 // pred_check_branch
      %44 = sbr.rel (0) target = $region17
    $region16: #{tpu_custom_call.1} parent=1 // pred_region
      %45 = dma.done [#allocation4], 512
    $region17: #{tpu_custom_call.1} parent=1 // pred_fallthru
      _
    %46 = vsyncpa [#allocation3], 1
    %47 = vsyncpa [#allocation4], 1

</llo_original>
